<compile_context>
chip_gen: v5e
topology: v5e:2x2
jax: 0.10.0
libtpu: 0.0.40
codegen_flags: <defaults>
</compile_context>

<pallas_src>
import functools

import jax
import jax.numpy as jnp
from jax import lax
from jax.experimental import pallas as pl
from jax.experimental.pallas import tpu as pltpu


def _triple_loss_kernel(ie_row_ref, te_col_ref, d1_ref, d2_ref, *rest,
                        margin, hard_negative):
    if hard_negative:
        o_row_ref, o_col_ref, row_acc_ref = rest
    else:
        o_row_ref, row_acc_ref = rest
        o_col_ref = None

    i = pl.program_id(0)
    j = pl.program_id(1)
    gc = pl.num_programs(1)
    tm = ie_row_ref.shape[0]
    tn = te_col_ref.shape[0]

    # Scores tile on the MXU: native input dtype, f32 accumulation, no transpose.
    scores = lax.dot_general(
        ie_row_ref[...], te_col_ref[...],
        dimension_numbers=(((1,), (1,)), ((), ())),
        preferred_element_type=jnp.float32)            # (tm, tn)

    base = scores + margin                             # shared by both costs
    d1 = d1_ref[...]                                   # (tm, 1) positive scores
    d2 = d2_ref[...]                                   # (1, tn) positive scores

    @pl.when(j == 0)
    def _init_row_acc():
        row_acc_ref[...] = jnp.zeros_like(row_acc_ref)

    def accumulate(cost_i, cost_t):
        if not hard_negative:
            # Per-row partial sums; reduced to a scalar only once per row tile.
            row_acc_ref[...] += jnp.sum(cost_i + cost_t, axis=1, keepdims=True)
        else:
            # Costs are >= 0 and the diagonal is masked, so zero init is exact.
            row_acc_ref[...] = jnp.maximum(
                row_acc_ref[...], jnp.max(cost_i, axis=1, keepdims=True))
            # Per-(row-tile, col-tile) column max, reduced over row tiles in
            # XLA -> the row grid axis stays "parallel" (2-TC chips).
            o_col_ref[...] = jnp.max(cost_t, axis=0, keepdims=True)[None]

    # The eye mask only matters on tiles that intersect the diagonal.
    row0 = i * tm
    col0 = j * tn
    on_diag = jnp.logical_and(row0 < col0 + tn, col0 < row0 + tm)

    @pl.when(on_diag)
    def _masked_tile():
        g_row = row0 + lax.broadcasted_iota(jnp.int32, (tm, tn), 0)
        g_col = col0 + lax.broadcasted_iota(jnp.int32, (tm, tn), 1)
        eye = g_row == g_col
        accumulate(jnp.where(eye, 0.0, jnp.maximum(base - d1, 0.0)),
                   jnp.where(eye, 0.0, jnp.maximum(base - d2, 0.0)))

    @pl.when(jnp.logical_not(on_diag))
    def _plain_tile():
        accumulate(jnp.maximum(base - d1, 0.0),
                   jnp.maximum(base - d2, 0.0))

    @pl.when(j == gc - 1)
    def _finalize_row_tile():
        o_row_ref[...] = jnp.sum(row_acc_ref[...], axis=(0, 1),
                                 keepdims=True)[None]


def _round_up(x, m):
    return (x + m - 1) // m * m


def _vmem_capacity_bytes():
    try:
        cap = getattr(pltpu.get_tpu_info(), "vmem_capacity_bytes", None)
        if cap:
            return int(cap)
    except Exception:
        pass
    return 128 * 1024 * 1024


def _choose_tiling(n, d, itemsize, budget_bytes):
    """Pick (n_pad, tm, tn): padded batch plus decoupled row/col tiles."""
    n_pad = _round_up(n, 8)
    if n_pad > 512:
        n_pad = _round_up(n, 128)
        if n_pad % 512 == 0:
            tn = 512
        elif n_pad % 256 == 0:
            tn = 256
        else:
            tn = 128
    else:
        tn = n_pad

    d_eff = d + 2  # up to two masking dims appended when n needs padding

    def fits(tm):
        need = (2 * tm * d_eff * itemsize        # ie row blocks (double-buffered)
                + 2 * tn * d_eff * itemsize      # te col blocks (double-buffered)
                + 3 * tm * 128 * 4               # d1 blocks + row scratch (lane-padded)
                + 6 * 8 * max(tn, 128) * 4       # d2 + col-max blocks (sublane-padded)
                + 4 * tm * tn * 4                # scores / clamp temporaries
                + (2 << 20))                     # headroom
        return need <= budget_bytes

    # Row tile: as large as the VMEM budget allows -- per-step column DMA is
    # amortized over tm rows, moving the kernel off the HBM roofline.
    for cand in (n_pad, 4096, 2048, 1024, 512, 256, 128, 64, 32, 16, 8):
        if cand <= n_pad and n_pad % cand == 0 and fits(cand):
            return n_pad, cand, tn
    return n_pad, 8, tn


def triple_net_loss(ie, te, margin=0.2, hard_negative=False, compute_dtype=None):
    """Pallas TPU implementation of TripleNetLoss.forward. Returns a scalar."""
    assert ie.shape == te.shape and ie.ndim == 2
    if compute_dtype is not None:
        # Optional bf16 streaming / MXU path. Numerics-affecting; off by default.
        ie = ie.astype(compute_dtype)
        te = te.astype(compute_dtype)
    n, d = ie.shape
    itemsize = jnp.dtype(ie.dtype).itemsize

    cap = _vmem_capacity_bytes()                           # 128 MiB v5e/v6e, 64 MiB v7x
    vmem_limit = max(min(int(cap * 0.75), cap - (16 << 20)), 32 << 20)
    n_pad, tm, tn = _choose_tiling(n, d, itemsize, int(vmem_limit * 0.8))
    gr, gc = n_pad // tm, n_pad // tn

    # Positive-pair similarities, computed once outside the kernel (O(N*D)).
    diag = jnp.sum(ie.astype(jnp.float32) * te.astype(jnp.float32), axis=1)

    if n_pad != n:
        pad = n_pad - n
        # Two extra feature dims force scores[real,pad] = scores[pad,real] = -1e9
        # and padded diag entries are +1e9, so padded rows/columns contribute
        # exactly 0 after the clamp (no in-kernel padding mask needed).
        ie_k = jnp.concatenate([
            jnp.concatenate([ie, jnp.zeros((n, 1), ie.dtype),
                             jnp.full((n, 1), -1e9, ie.dtype)], axis=1),
            jnp.concatenate([jnp.zeros((pad, d), ie.dtype),
                             jnp.ones((pad, 1), ie.dtype),
                             jnp.zeros((pad, 1), ie.dtype)], axis=1)], axis=0)
        te_k = jnp.concatenate([
            jnp.concatenate([te, jnp.full((n, 1), -1e9, te.dtype),
                             jnp.zeros((n, 1), te.dtype)], axis=1),
            jnp.concatenate([jnp.zeros((pad, d), te.dtype),
                             jnp.zeros((pad, 1), te.dtype),
                             jnp.ones((pad, 1), te.dtype)], axis=1)], axis=0)
        diag = jnp.concatenate([diag, jnp.full((pad,), 1e9, jnp.float32)])
        d_k = d + 2
    else:
        ie_k, te_k, d_k = ie, te, d

    d1 = diag.reshape(n_pad, 1)
    d2 = diag.reshape(1, n_pad)

    kernel = functools.partial(_triple_loss_kernel, margin=float(margin),
                               hard_negative=bool(hard_negative))

    in_specs = [
        pl.BlockSpec((tm, d_k), lambda i, j: (i, 0)),   # ie rows
        pl.BlockSpec((tn, d_k), lambda i, j: (j, 0)),   # te cols
        pl.BlockSpec((tm, 1), lambda i, j: (i, 0)),     # d1 (positive / row)
        pl.BlockSpec((1, tn), lambda i, j: (0, j)),     # d2 (positive / col)
    ]

    if hard_negative:
        out_shape = (jax.ShapeDtypeStruct((gr, 1, 1), jnp.float32),
                     jax.ShapeDtypeStruct((gr, 1, n_pad), jnp.float32))
        out_specs = (pl.BlockSpec((1, 1, 1), lambda i, j: (i, 0, 0)),
                     pl.BlockSpec((1, 1, tn), lambda i, j: (i, 0, j)))
    else:
        out_shape = jax.ShapeDtypeStruct((gr, 1, 1), jnp.float32)
        out_specs = pl.BlockSpec((1, 1, 1), lambda i, j: (i, 0, 0))

    # te (and d2) are re-streamed once per row tile; ie / d1 stream once.
    bytes_accessed = ((gr + 1) * n_pad * d_k * itemsize
                      + (gr + 1) * n_pad * 4
                      + gr * (n_pad + 1) * 4)

    out = pl.pallas_call(
        kernel,
        out_shape=out_shape,
        grid_spec=pltpu.PrefetchScalarGridSpec(
            num_scalar_prefetch=0,
            grid=(gr, gc),
            in_specs=in_specs,
            out_specs=out_specs,
            scratch_shapes=[pltpu.VMEM((tm, 1), jnp.float32)]),
        compiler_params=pltpu.CompilerParams(
            dimension_semantics=("parallel", "arbitrary"),
            vmem_limit_bytes=int(vmem_limit)),
        cost_estimate=pl.CostEstimate(
            flops=2 * n_pad * n_pad * d_k,
            transcendentals=0,
            bytes_accessed=int(bytes_accessed)),
    )(ie_k, te_k, d1, d2)

    if hard_negative:
        o_row, o_col = out
        return jnp.sum(o_row) + jnp.sum(jnp.max(o_col[:, 0, :], axis=0))
    return jnp.sum(out)


def _reference_loss(ie, te, margin=0.2, hard_negative=False):
    ie = ie.astype(jnp.float32)
    te = te.astype(jnp.float32)
    scores = jnp.matmul(ie, te.T, precision=lax.Precision.HIGHEST)
    diag = jnp.diag(scores)
    cost_i = jnp.maximum(margin + scores - diag[:, None], 0.0)
    cost_t = jnp.maximum(margin + scores - diag[None, :], 0.0)
    eye = jnp.eye(scores.shape[0], dtype=bool)
    cost_i = jnp.where(eye, 0.0, cost_i)
    cost_t = jnp.where(eye, 0.0, cost_t)
    if hard_negative:
        cost_i = cost_i.max(axis=1)
        cost_t = cost_t.max(axis=0)
    return cost_t.sum() + cost_i.sum()


if __name__ == "__main__":
    key = jax.random.PRNGKey(0)
    k1, k2, k3, k4 = jax.random.split(key, 4)

    # Batch of 8 image/text embedding pairs, hidden = 32 (VSE++-style, L2-norm).
    N, D = 8, 32
    ie = jax.random.normal(k1, (N, D), dtype=jnp.float32)
    te = jax.random.normal(k2, (N, D), dtype=jnp.float32)
    ie = ie / jnp.linalg.norm(ie, axis=1, keepdims=True)
    te = te / jnp.linalg.norm(te, axis=1, keepdims=True)

    for hn in (False, True):
        loss = triple_net_loss(ie, te, margin=0.2, hard_negative=hn)
        jax.block_until_ready(loss)
        ref = _reference_loss(ie, te, margin=0.2, hard_negative=hn)
        assert jnp.allclose(loss, ref, rtol=1e-3, atol=1e-3), (hn, loss, ref)

    # Non-tile-divisible batch exercises the padding path.
    N2 = 5
    ie2 = jax.random.normal(k3, (N2, D), dtype=jnp.float32)
    te2 = jax.random.normal(k4, (N2, D), dtype=jnp.float32)
    ie2 = ie2 / jnp.linalg.norm(ie2, axis=1, keepdims=True)
    te2 = te2 / jnp.linalg.norm(te2, axis=1, keepdims=True)

    for hn in (False, True):
        loss = triple_net_loss(ie2, te2, margin=0.2, hard_negative=hn)
        jax.block_until_ready(loss)
        ref = _reference_loss(ie2, te2, margin=0.2, hard_negative=hn)
        assert jnp.allclose(loss, ref, rtol=1e-3, atol=1e-3), (hn, loss, ref)

    print("KERNEL_OK")
</pallas_src>

<mosaic_0001>
module attributes {stable_mosaic.version = 11 : i64} {
  func.func @_triple_loss_kernel(%arg0: i32, %arg1: i32, %arg2: memref<8x32xf32, #tpu.memory_space<vmem>>, %arg3: memref<8x32xf32, #tpu.memory_space<vmem>>, %arg4: memref<8x1xf32, #tpu.memory_space<vmem>>, %arg5: memref<1x8xf32, #tpu.memory_space<vmem>>, %arg6: memref<1x1x1xf32, #tpu.memory_space<vmem>>, %arg7: memref<8x1xf32, #tpu.memory_space<vmem>>) attributes {dimension_semantics = [#tpu.dimension_semantics<parallel>, #tpu.dimension_semantics<arbitrary>], iteration_bounds = array<i64: 1, 1>, scalar_prefetch = 0 : i64, scratch_operands = 1 : i64, tpu.core_type = #tpu.core_type<tc>, window_params = [{transform_indices = @transform_0, window_bounds = array<i64: 8, 32>}, {transform_indices = @transform_1, window_bounds = array<i64: 8, 32>}, {transform_indices = @transform_2, window_bounds = array<i64: 8, 1>}, {transform_indices = @transform_3, window_bounds = array<i64: 1, 8>}, {transform_indices = @transform_4, window_bounds = array<i64: 1, 1, 1>}]} {
    %c0 = arith.constant 0 : index
    %c0_0 = arith.constant 0 : index
    %0 = vector.load %arg2[%c0, %c0_0] : memref<8x32xf32, #tpu.memory_space<vmem>>, vector<8x32xf32>
    %c0_1 = arith.constant 0 : index
    %c0_2 = arith.constant 0 : index
    %1 = vector.load %arg3[%c0_1, %c0_2] : memref<8x32xf32, #tpu.memory_space<vmem>>, vector<8x32xf32>
    %cst = arith.constant dense<0.000000e+00> : vector<8x8xf32>
    %2 = tpu.matmul %0, %1, %cst {dimension_numbers = #tpu.dot_dimension_numbers<[1], [1], [0], [0], [0, 0, 1, 0], [], []>} : vector<8x32xf32>, vector<8x32xf32>, vector<8x8xf32> -> vector<8x8xf32>
    %cst_3 = arith.constant 2.000000e-01 : f32
    %3 = vector.broadcast %cst_3 : f32 to vector<8x8xf32>
    %4 = arith.addf %2, %3 : vector<8x8xf32>
    %c0_4 = arith.constant 0 : index
    %c0_5 = arith.constant 0 : index
    %5 = vector.load %arg4[%c0_4, %c0_5] : memref<8x1xf32, #tpu.memory_space<vmem>>, vector<8x1xf32>
    %c0_6 = arith.constant 0 : index
    %c0_7 = arith.constant 0 : index
    %6 = vector.load %arg5[%c0_6, %c0_7] : memref<1x8xf32, #tpu.memory_space<vmem>>, vector<1x8xf32>
    %c0_i32 = arith.constant 0 : i32
    %7 = arith.cmpi eq, %arg1, %c0_i32 : i32
    %8 = arith.extui %7 : i1 to i32
    %c0_i32_8 = arith.constant 0 : i32
    %9 = arith.cmpi ne, %8, %c0_i32_8 : i32
    scf.if %9 {
      %cst_16 = arith.constant 0.000000e+00 : f32
      %25 = vector.broadcast %cst_16 : f32 to vector<8x1xf32>
      %c0_17 = arith.constant 0 : index
      %c0_18 = arith.constant 0 : index
      %26 = vector.load %arg7[%c0_17, %c0_18] : memref<8x1xf32, #tpu.memory_space<vmem>>, vector<8x1xf32>
      tpu.vector_store %arg7[%c0_17, %c0_18], %25 {strides = array<i32>} : memref<8x1xf32, #tpu.memory_space<vmem>>, vector<8x1xf32>,
    } else {
    }
    %c8_i32 = arith.constant 8 : i32
    %10 = arith.muli %arg0, %c8_i32 : i32
    %c8_i32_9 = arith.constant 8 : i32
    %11 = arith.muli %arg1, %c8_i32_9 : i32
    %c8_i32_10 = arith.constant 8 : i32
    %12 = arith.addi %11, %c8_i32_10 : i32
    %13 = arith.cmpi slt, %10, %12 : i32
    %c8_i32_11 = arith.constant 8 : i32
    %14 = arith.addi %10, %c8_i32_11 : i32
    %15 = arith.cmpi slt, %11, %14 : i32
    %16 = arith.andi %13, %15 : i1
    %17 = arith.extui %16 : i1 to i32
    %c0_i32_12 = arith.constant 0 : i32
    %18 = arith.cmpi ne, %17, %c0_i32_12 : i32
    scf.if %18 {
      %25 = tpu.iota {dimensions = array<i32: 0>} : vector<8x8xi32>
      %26 = vector.broadcast %10 : i32 to vector<8x8xi32>
      %27 = arith.addi %26, %25 : vector<8x8xi32>
      %28 = tpu.iota {dimensions = array<i32: 1>} : vector<8x8xi32>
      %29 = vector.broadcast %11 : i32 to vector<8x8xi32>
      %30 = arith.addi %29, %28 : vector<8x8xi32>
      %31 = arith.cmpi eq, %27, %30 : vector<8x8xi32>
      %32 = vector.broadcast %5 : vector<8x1xf32> to vector<8x8xf32>
      %33 = arith.subf %4, %32 : vector<8x8xf32>
      %cst_16 = arith.constant 0.000000e+00 : f32
      %34 = vector.broadcast %cst_16 : f32 to vector<8x8xf32>
      %35 = arith.maximumf %33, %34 : vector<8x8xf32>
      %cst_17 = arith.constant 0.000000e+00 : f32
      %36 = vector.broadcast %cst_17 : f32 to vector<8x8xf32>
      %37 = arith.select %31, %36, %35 : vector<8x8xi1>, vector<8x8xf32>
      %38 = vector.broadcast %6 : vector<1x8xf32> to vector<8x8xf32>
      %39 = arith.subf %4, %38 : vector<8x8xf32>
      %cst_18 = arith.constant 0.000000e+00 : f32
      %40 = vector.broadcast %cst_18 : f32 to vector<8x8xf32>
      %41 = arith.maximumf %39, %40 : vector<8x8xf32>
      %cst_19 = arith.constant 0.000000e+00 : f32
      %42 = vector.broadcast %cst_19 : f32 to vector<8x8xf32>
      %43 = arith.select %31, %42, %41 : vector<8x8xi1>, vector<8x8xf32>
      %c0_20 = arith.constant 0 : index
      %c0_21 = arith.constant 0 : index
      %44 = vector.load %arg7[%c0_20, %c0_21] : memref<8x1xf32, #tpu.memory_space<vmem>>, vector<8x1xf32>
      %45 = arith.addf %37, %43 : vector<8x8xf32>
      %cst_22 = arith.constant dense<0.000000e+00> : vector<8xf32>
      %46 = vector.multi_reduction <add>, %45, %cst_22 [1] : vector<8x8xf32> to vector<8xf32>
      %47 = vector.shape_cast %46 : vector<8xf32> to vector<8x1xf32>
      %48 = arith.addf %44, %47 : vector<8x1xf32>
      %c0_23 = arith.constant 0 : index
      %c0_24 = arith.constant 0 : index
      %49 = vector.load %arg7[%c0_23, %c0_24] : memref<8x1xf32, #tpu.memory_space<vmem>>, vector<8x1xf32>
      tpu.vector_store %arg7[%c0_23, %c0_24], %48 {strides = array<i32>} : memref<8x1xf32, #tpu.memory_space<vmem>>, vector<8x1xf32>,
    } else {
    }
    %true = arith.constant true
    %19 = arith.xori %16, %true : i1
    %20 = arith.extui %19 : i1 to i32
    %c0_i32_13 = arith.constant 0 : i32
    %21 = arith.cmpi ne, %20, %c0_i32_13 : i32
    scf.if %21 {
      %25 = vector.broadcast %5 : vector<8x1xf32> to vector<8x8xf32>
      %26 = arith.subf %4, %25 : vector<8x8xf32>
      %cst_16 = arith.constant 0.000000e+00 : f32
      %27 = vector.broadcast %cst_16 : f32 to vector<8x8xf32>
      %28 = arith.maximumf %26, %27 : vector<8x8xf32>
      %29 = vector.broadcast %6 : vector<1x8xf32> to vector<8x8xf32>
      %30 = arith.subf %4, %29 : vector<8x8xf32>
      %cst_17 = arith.constant 0.000000e+00 : f32
      %31 = vector.broadcast %cst_17 : f32 to vector<8x8xf32>
      %32 = arith.maximumf %30, %31 : vector<8x8xf32>
      %c0_18 = arith.constant 0 : index
      %c0_19 = arith.constant 0 : index
      %33 = vector.load %arg7[%c0_18, %c0_19] : memref<8x1xf32, #tpu.memory_space<vmem>>, vector<8x1xf32>
      %34 = arith.addf %28, %32 : vector<8x8xf32>
      %cst_20 = arith.constant dense<0.000000e+00> : vector<8xf32>
      %35 = vector.multi_reduction <add>, %34, %cst_20 [1] : vector<8x8xf32> to vector<8xf32>
      %36 = vector.shape_cast %35 : vector<8xf32> to vector<8x1xf32>
      %37 = arith.addf %33, %36 : vector<8x1xf32>
      %c0_21 = arith.constant 0 : index
      %c0_22 = arith.constant 0 : index
      %38 = vector.load %arg7[%c0_21, %c0_22] : memref<8x1xf32, #tpu.memory_space<vmem>>, vector<8x1xf32>
      tpu.vector_store %arg7[%c0_21, %c0_22], %37 {strides = array<i32>} : memref<8x1xf32, #tpu.memory_space<vmem>>, vector<8x1xf32>,
    } else {
    }
    %c0_i32_14 = arith.constant 0 : i32
    %22 = arith.cmpi eq, %arg1, %c0_i32_14 : i32
    %23 = arith.extui %22 : i1 to i32
    %c0_i32_15 = arith.constant 0 : i32
    %24 = arith.cmpi ne, %23, %c0_i32_15 : i32
    scf.if %24 {
      %c0_16 = arith.constant 0 : index
      %c0_17 = arith.constant 0 : index
      %25 = vector.load %arg7[%c0_16, %c0_17] : memref<8x1xf32, #tpu.memory_space<vmem>>, vector<8x1xf32>
      %26 = vector.shape_cast %25 : vector<8x1xf32> to vector<1x8x1xf32>
      %cst_18 = arith.constant dense<0.000000e+00> : vector<1xf32>
      %27 = vector.multi_reduction <add>, %26, %cst_18 [1, 2] : vector<1x8x1xf32> to vector<1xf32>
      %28 = vector.shape_cast %27 : vector<1xf32> to vector<1x1x1xf32>
      %29 = vector.extract %28[0, 0, 0] : f32 from vector<1x1x1xf32>
      %30 = vector.broadcast %29 : f32 to vector<1x1xf32>
      %31 = vector.shape_cast %30 : vector<1x1xf32> to vector<1x1x1xf32>
      %c0_19 = arith.constant 0 : index
      %c0_20 = arith.constant 0 : index
      %c0_21 = arith.constant 0 : index
      %32 = vector.load %arg6[%c0_19, %c0_20, %c0_21] : memref<1x1x1xf32, #tpu.memory_space<vmem>>, vector<1x1x1xf32>
      tpu.vector_store %arg6[%c0_19, %c0_20, %c0_21], %31 {strides = array<i32>} : memref<1x1x1xf32, #tpu.memory_space<vmem>>, vector<1x1x1xf32>,
    } else {
    }
    return
  }
  func.func @transform_0(%arg0: i32, %arg1: i32) -> (i32, i32) {
    %c0_i32 = arith.constant 0 : i32
    %c0_i32_0 = arith.constant 0 : i32
    return %arg0, %c0_i32 : i32, i32
  }
  func.func @transform_1(%arg0: i32, %arg1: i32) -> (i32, i32) {
    %c0_i32 = arith.constant 0 : i32
    %c0_i32_0 = arith.constant 0 : i32
    return %arg1, %c0_i32 : i32, i32
  }
  func.func @transform_2(%arg0: i32, %arg1: i32) -> (i32, i32) {
    %c0_i32 = arith.constant 0 : i32
    %c0_i32_0 = arith.constant 0 : i32
    return %arg0, %c0_i32 : i32, i32
  }
  func.func @transform_3(%arg0: i32, %arg1: i32) -> (i32, i32) {
    %c0_i32 = arith.constant 0 : i32
    %c0_i32_0 = arith.constant 0 : i32
    return %c0_i32, %arg1 : i32, i32
  }
  func.func @transform_4(%arg0: i32, %arg1: i32) -> (i32, i32, i32) {
    %c0_i32 = arith.constant 0 : i32
    %c0_i32_0 = arith.constant 0 : i32
    %c0_i32_1 = arith.constant 0 : i32
    return %arg0, %c0_i32, %c0_i32_0 : i32, i32, i32
  }
}

</mosaic_0001>

<llo_original>
// kernel: tpu_custom_call.1
$region0: #{tpu_custom_call.1}
  #allocation0 [shape = 'u32[]', space=smem, size = 0x4, offset = 0x4, fixed_abs, tag = 'smem constant byte address 0x4 - core index']
  #allocation1 [shape = 'u32[72,128]{1,0:T(1,128)}', space=vmem, size = 0x9000, scoped, tag = 'internal scratch']
  #allocation2 [shape = 'f32[8,1]{1,0:T(8,128)}', space=vmem, size = 0x1000, scoped, tag = 'scratch operand']
  %s0 = inlined_call_operand.vmem [shape: f32[8,32], index: 0, kind: input, shape index: {}]
  %s1 = inlined_call_operand.hbm [shape: f32[8,32], index: 1, kind: input, shape index: {}]
  %s2 = inlined_call_operand.vmem [shape: f32[8,1], index: 2, kind: input, shape index: {}]
  %s3 = inlined_call_operand.vmem [shape: f32[1,8], index: 3, kind: input, shape index: {}]
  %s4 = inlined_call_operand.hbm [shape: f32[1,1,1], index: 4, kind: output, shape index: {}]
  %s5 = sld [smem:[#allocation0]]
  $region46: #{tpu_custom_call.1} parent=0
    _
  %s7 = ssub.s32 1, %s5
  %s8 = scalar_select 0, %s7, %s5
  $region1: #{tpu_custom_call.1} parent=0
    #allocation3 [shape = 'u8[4096]{0}', space=vmem, size = 0x1000, scoped, tag = 'input window, operand 1, single buffered']
    #allocation4 [shape = 's32[1]{0}', space=sflag, size = 0x4, scoped, tag = 'scoped memory for tpu_custom_call.1']
    #allocation5 [shape = 's32[1]{0}', space=sflag, size = 0x4, scoped, tag = 'scoped memory for tpu_custom_call.1']
    #allocation6 [shape = 'u8[512]{0}', space=vmem, size = 0x400, scoped, tag = 'output window, operand 0, single buffered']
    %9 = vsyncpa [#allocation4], 0
    %10 = vsyncpa [#allocation5], 0
    // Predicated region
    $region2: #{tpu_custom_call.1} parent=1 // pred_check
      _
    $region3: #{tpu_custom_call.1} parent=1 // pred_check_branch
      %12 = sbr.rel (0) target = $region5
    $region4: #{tpu_custom_call.1} parent=1 // pred_region
      _
    $region5: #{tpu_custom_call.1} parent=1 // pred_fallthru
      _
    // Predicated region
    $region6: #{tpu_custom_call.1} parent=1 // pred_check
      _
    $region7: #{tpu_custom_call.1} parent=1 // pred_check_branch
      %14 = sbr.rel (0) target = $region9
    $region8: #{tpu_custom_call.1} parent=1 // pred_region
      %16 = vsyncadd [#allocation4], 0
      %s18 = sshll.u32 %s1, 4
      %s19 = int_to_ptr.hbm [resolvable:$true] %s18
      %s20 = sshll.u32 [#allocation3], 4
      %s21 = int_to_ptr.vmem [resolvable:$true] %s20
      %23 = dma.hbm_to_vmem [thread:$0]  %s19, 128, %s21, [#allocation4]
    $region9: #{tpu_custom_call.1} parent=1 // pred_fallthru
      _
    // Predicated region
    $region10: #{tpu_custom_call.1} parent=1 // pred_check
      _
    $region11: #{tpu_custom_call.1} parent=1 // pred_check_branch
      %25 = sbr.rel (0) target = $region13
    $region12: #{tpu_custom_call.1} parent=1 // pred_region
      _
    $region13: #{tpu_custom_call.1} parent=1 // pred_fallthru
      _
    // Predicated region
    $region14: #{tpu_custom_call.1} parent=1 // pred_check
      _
    $region15: #{tpu_custom_call.1} parent=1 // pred_check_branch
      %27 = sbr.rel (0) target = $region17
    $region16: #{tpu_custom_call.1} parent=1 // pred_region
      _
    $region17: #{tpu_custom_call.1} parent=1 // pred_fallthru
      _
    // Predicated region
    $region18: #{tpu_custom_call.1} parent=1 // pred_check
      _
    $region19: #{tpu_custom_call.1} parent=1 // pred_check_branch
      %29 = sbr.rel (0) target = $region21
    $region20: #{tpu_custom_call.1} parent=1 // pred_region
      %31 = dma.done [#allocation4], 128
    $region21: #{tpu_custom_call.1} parent=1 // pred_fallthru
      _
    %v32 = vld [vmem:[%s0] sm:$0xff]
    %v33 = vld [vmem:[#allocation3] sm:$0xff]
    %vm34 = vcmask 261120
    %v36 = vsel %vm34, %v32, 0
    %v39 = vsel %vm34, %v33, 0
    %41 = vmatpush.xpose.msra.mxu0 0.0
    %42 = vmatpush.xpose.msra.mxu0 0.0
    %43 = vmatpush.xpose.msra.mxu0 0.0
    %44 = vmatpush.xpose.msra.mxu0 0.0
    %45 = vmatpush.xpose.msra.mxu0 0.0
    %46 = vmatpush.xpose.msra.mxu0 0.0
    %47 = vmatpush.xpose.msra.mxu0 0.0
    %48 = vmatpush.xpose.msra.mxu0 0.0
    %49 = vmatpush.xpose.msra.mxu0 0.0
    %50 = vmatpush.xpose.msra.mxu0 0.0
    %51 = vmatpush.xpose.msra.mxu0 0.0
    %52 = vmatpush.xpose.msra.mxu0 0.0
    %53 = vmatpush.xpose.msra.mxu0 0.0
    %54 = vmatpush.xpose.msra.mxu0 0.0
    %55 = vmatpush.xpose.msra.mxu0 0.0
    %56 = vmatpush.xpose.msra.mxu0 %v39
    %57 = vmatmul.f32.gmra.mxu0 %v36
    %v58 = vpop.f32.mrf.mxu0
    %v59 = vadd.f32 0.2, %v58
    %60 = vdwg.mxu0
    %v61 = vld [vmem:[%s2] sm:$0xff]
    %v62 = vld [vmem:[%s3] sm:$0x1]
    %p63 = scmp.eq.s32.totalorder 0, 0
    // Predicated region
    $region22: #{tpu_custom_call.1} parent=1 // pred_check
      %p64 = pneg %p63
    $region23: #{tpu_custom_call.1} parent=1 // pred_check_branch
      %66 = sbr.rel (%p64) target = $region25
    $region24: #{tpu_custom_call.1} parent=1 // pred_region
      %vm67 = vcmask 7168
      %68 = vst.msk [vmem:[#allocation2] sm:$0xff] %vm67, 0.0
    $region25: #{tpu_custom_call.1} parent=1 // pred_fallthru
      _
    %s69 = smul.u32 0, 8
    %s70 = smul.u32 0, 8
    %s71 = sadd.s32 %s70, 8
    %p72 = scmp.lt.s32.totalorder %s69, %s71
    %s73 = sadd.s32 %s69, 8
    %p74 = scmp.lt.s32.totalorder %s70, %s73
    %p75 = pnand %p72, %p74
    %p76 = pneg %p75
    // Predicated region
    $region26: #{tpu_custom_call.1} parent=1 // pred_check
      _
    $region27: #{tpu_custom_call.1} parent=1 // pred_check_branch
      %78 = sbr.rel (%p75) target = $region29
    $region28: #{tpu_custom_call.1} parent=1 // pred_region
      %v79 = vlaneseq
      %v80 = vshrl.u32 %v79, 7
      %v81 = vstv %s69
      %v82 = vadd.s32 %v81, %v80
      %v83 = vlaneseq
      %v84 = vand.u32 %v83, 127
      %v85 = vstv %s70
      %v86 = vadd.s32 %v85, %v84
      %vm87 = vcmp.eq.s32.totalorder %v82, %v86
      %89 = vset.pattern.permute.xlu0 0
      %90 = vperm.xlu0 %89, %v61
      %v91 = vpop.permute.xlu0 %90
      %v93 = vsub.f32 %v59, %v91
      %v94 = vmax.f32 %v93, 0.0
      %v95 = vsel %vm87, 0.0, %v94
      %v97 = vperm.slane %v62, 0
      %v99 = vsub.f32 %v59, %v97
      %v100 = vmax.f32 %v99, 0.0
      %v101 = vsel %vm87, 0.0, %v100
      %v102 = vld [vmem:[#allocation2] sm:$0xff]
      %v103 = vadd.f32 %v95, %v101
      %vm104 = vcmask 64512
      %v105 = vsel %vm104, %v103, 0.0
      %106 = vadd.xlane.f32.xlu0 %v105
      %v107 = vpop.xlane.xlu0 %106
      %v108 = vadd.f32 %v102, %v107
      %vm109 = vcmask 7168
      %110 = vst.msk [vmem:[#allocation2] sm:$0xff] %vm109, %v108
    $region29: #{tpu_custom_call.1} parent=1 // pred_fallthru
      _
    %p111 = pneg %p76
    // Predicated region
    $region30: #{tpu_custom_call.1} parent=1 // pred_check
      _
    $region31: #{tpu_custom_call.1} parent=1 // pred_check_branch
      %113 = sbr.rel (%p76) target = $region33
    $region32: #{tpu_custom_call.1} parent=1 // pred_region
      %115 = vset.pattern.permute.xlu0 0
      %116 = vperm.xlu0 %115, %v61
      %v117 = vpop.permute.xlu0 %116
      %v119 = vsub.f32 %v59, %v117
      %v120 = vmax.f32 %v119, 0.0
      %v122 = vperm.slane %v62, 0
      %v124 = vsub.f32 %v59, %v122
      %v125 = vmax.f32 %v124, 0.0
      %v126 = vld [vmem:[#allocation2] sm:$0xff]
      %v127 = vadd.f32 %v120, %v125
      %vm128 = vcmask 64512
      %v129 = vsel %vm128, %v127, 0.0
      %130 = vadd.xlane.f32.xlu0 %v129
      %v131 = vpop.xlane.xlu0 %130
      %v132 = vadd.f32 %v126, %v131
      %vm133 = vcmask 7168
      %134 = vst.msk [vmem:[#allocation2] sm:$0xff] %vm133, %v132
    $region33: #{tpu_custom_call.1} parent=1 // pred_fallthru
      _
    // Predicated region
    $region34: #{tpu_custom_call.1} parent=1 // pred_check
      %p135 = pneg %p63
    $region35: #{tpu_custom_call.1} parent=1 // pred_check_branch
      %137 = sbr.rel (%p135) target = $region37
    $region36: #{tpu_custom_call.1} parent=1 // pred_region
      %v138 = vld [vmem:[#allocation2] sm:$0xff]
      %vm139 = vcmask 7168
      %v140 = vsel %vm139, %v138, 0.0
      %141 = vadd.xlane.f32.xlu0 %v140
      %v142 = vpop.xlane.xlu0 %141
      %v143 = vrot.slane %v142, 4
      %v144 = vadd.f32 %v142, %v143
      %v145 = vrot.slane %v144, 2
      %v146 = vadd.f32 %v144, %v145
      %v147 = vrot.slane %v146, 1
      %v148 = vadd.f32 %v146, %v147
      %s149 = vtos %v148
      %v150 = vstv %s149
      %vm151 = vcmask 0
      %152 = vst.msk [vmem:[#allocation6] sm:$0x1] %vm151, %v150
    $region37: #{tpu_custom_call.1} parent=1 // pred_fallthru
      _
    // Predicated region
    $region38: #{tpu_custom_call.1} parent=1 // pred_check
      _
    $region39: #{tpu_custom_call.1} parent=1 // pred_check_branch
      %154 = sbr.rel (0) target = $region41
    $region40: #{tpu_custom_call.1} parent=1 // pred_region
      %156 = vsyncadd [#allocation5], 0
      %s158 = sshll.u32 [#allocation6], 4
      %s159 = int_to_ptr.vmem [resolvable:$true] %s158
      %s160 = sshll.u32 %s4, 4
      %s161 = int_to_ptr.hbm [resolvable:$true] %s160
      %163 = dma.vmem_to_hbm [thread:$0]  %s159, 16, %s161, [#allocation5]
    $region41: #{tpu_custom_call.1} parent=1 // pred_fallthru
      _
    // Predicated region
    $region42: #{tpu_custom_call.1} parent=1 // pred_check
      _
    $region43: #{tpu_custom_call.1} parent=1 // pred_check_branch
      %165 = sbr.rel (0) target = $region45
    $region44: #{tpu_custom_call.1} parent=1 // pred_region
      %167 = dma.done [#allocation5], 16
    $region45: #{tpu_custom_call.1} parent=1 // pred_fallthru
      _
    %168 = vsyncpa [#allocation4], 1
    %169 = vsyncpa [#allocation5], 1

</llo_original>
